<compile_context>
chip_gen: v6e
topology: v6e:2x2x1
jax: 0.10.0
libtpu: 0.0.40
codegen_flags: <defaults>
</compile_context>

<pallas_src>
import functools

import jax
import jax.numpy as jnp
from jax import lax
from jax.experimental import pallas as pl
from jax.experimental.pallas import tpu as pltpu


def _shift_flat(q, s):
    """Zero-fill shift along the flattened spatial (lane) axis.

    out[:, j] = q[:, j + s] if 0 <= j + s < M else 0   (s is a static int).

    NOTE: this could also be a pltpu.roll (XLU) + mask; with the planar
    lane-dense layout the zero-fill shift materializes exactly the single
    staging copy the K-packed patch needs anyway, so the cost is the same.
    """
    c, m = q.shape
    if s == 0:
        return q
    z = jnp.zeros((c, abs(s)), dtype=q.dtype)
    if s > 0:
        return jnp.concatenate([q[:, s:], z], axis=1)
    return jnp.concatenate([z, q[:, :m + s]], axis=1)


def flow_head_kernel(x_ref, w1_ref, w2_ref, b1_ref, b2_ref, cmask_ref,
                     o_ref, patch_ref, *, width):
    # x_ref    : (1, Cin, M)   bf16  planar input, M = H*W flattened
    # w1_ref   : (Chid, 9*Cin) bf16  conv1 taps folded into K, col = t*Cin + c
    # w2_ref   : (18, Chid)    bf16  conv2 taps packed along M, row = 2*t + cout
    # b1_ref   : (Chid, 1)     f32
    # b2_ref   : (2, 1)        f32
    # cmask_ref: (2, M)        f32   row 0: col != 0 (dc=-1), row 1: col != W-1 (dc=+1)
    # o_ref    : (1, 2, M)     f32   planar (NCHW-flattened) output
    # patch_ref: (9*Cin, M)    bf16  VMEM scratch: shifted-tap stack, rebuilt per step
    cin = x_ref.shape[1]
    m = x_ref.shape[2]

    xf = x_ref[0]                                   # (Cin, M) bf16
    cmask = cmask_ref[...]                          # (2, M)   f32
    cmask_b = cmask.astype(jnp.bfloat16)

    # ---- build the 9-tap patch stack (zero-fill shifts of the flat input) ----
    # Each tap's temporaries die at the store into the single patch scratch.
    for di in range(3):
        for dj in range(3):
            t = 3 * di + dj
            dr, dc = di - 1, dj - 1
            sh = _shift_flat(xf, dr * width + dc)
            if dc == -1:                            # exact padding=1 at column 0
                sh = sh * cmask_b[0:1, :]
            elif dc == 1:                           # exact padding=1 at column W-1
                sh = sh * cmask_b[1:2, :]
            patch_ref[t * cin:(t + 1) * cin, :] = sh

    # ---- conv1: ONE matmul with K = 9*Cin (full MXU depth), f32 accum in-MXU ----
    acc = jnp.dot(w1_ref[...], patch_ref[...],
                  preferred_element_type=jnp.float32)            # (Chid, M) f32
    hid = jnp.maximum(acc + b1_ref[...], 0.0).astype(jnp.bfloat16)

    # ---- conv2: ONE packed matmul, then lane-dense planar shift-adds ----
    p = jnp.dot(w2_ref[...], hid, preferred_element_type=jnp.float32)  # (18, M) f32

    out2 = jnp.zeros((2, m), dtype=jnp.float32)
    for di in range(3):
        for dj in range(3):
            t = 3 * di + dj
            dr, dc = di - 1, dj - 1
            q = _shift_flat(p[2 * t:2 * t + 2, :], dr * width + dc)
            if dc == -1:
                q = q * cmask[0:1, :]
            elif dc == 1:
                q = q * cmask[1:2, :]
            out2 = out2 + q

    out2 = out2 + b2_ref[...]                                    # (2, M) + (2, 1)
    o_ref[...] = out2.reshape(1, 2, m).astype(o_ref.dtype)


def _pick_vmem_limit():
    """96 MiB on 128-MiB chips (v5e/v6e); 3/4 of physical elsewhere (v7x: 48 MiB)."""
    phys = 64 * 1024 * 1024
    try:
        phys = int(getattr(pltpu.get_tpu_info(), "vmem_capacity_bytes", phys))
    except Exception:
        pass
    return min(96 * 1024 * 1024, (phys * 3) // 4)


def flow_head(x_nchw, w1, b1, w2, b2):
    """FlowHead forward.

    x_nchw: (N, Cin, H, W) f32
    w1:     (3, 3, Cin, Chid)  HWIO (== PyTorch conv1.weight.permute(2, 3, 1, 0))
    b1:     (Chid,)
    w2:     (3, 3, Chid, 2)    HWIO (== PyTorch conv2.weight.permute(2, 3, 1, 0))
    b2:     (2,)
    Returns (N, 2, H, W) f32 (NCHW, same as the PyTorch module).
    """
    N, Cin, H, W = x_nchw.shape
    Chid = w1.shape[-1]
    M = H * W

    # Planar + flattened spatial: free metadata reshape of the NCHW tensor
    # (no relayout); bf16 staging for the MXU (reference also rounds x to bf16).
    xb = x_nchw.reshape(N, Cin, M).astype(jnp.bfloat16)

    # conv1 taps folded into K: (3,3,Cin,Chid) -> (Chid, 9*Cin), col = t*Cin + c.
    w1_k = jnp.transpose(w1, (3, 0, 1, 2)).reshape(Chid, 9 * Cin).astype(jnp.bfloat16)
    # conv2 taps packed along the output dim: (3,3,Chid,2) -> (18, Chid), row = 2*t + cout.
    w2_k = jnp.transpose(w2, (0, 1, 3, 2)).reshape(18, Chid).astype(jnp.bfloat16)
    b1_c = b1.reshape(Chid, 1).astype(jnp.float32)
    b2_c = b2.reshape(2, 1).astype(jnp.float32)

    # Column-validity masks for the +/-1 column shifts (exact zero padding).
    col = jnp.arange(M, dtype=jnp.int32) % W
    cmask = jnp.stack([col != 0, col != (W - 1)], axis=0).astype(jnp.float32)

    kernel = functools.partial(flow_head_kernel, width=W)

    out_flat = pl.pallas_call(
        kernel,
        out_shape=jax.ShapeDtypeStruct((N, 2, M), jnp.float32),
        grid=(N,),
        in_specs=[
            pl.BlockSpec((1, Cin, M), lambda n: (n, 0, 0)),
            pl.BlockSpec((Chid, 9 * Cin), lambda n: (0, 0)),
            pl.BlockSpec((18, Chid), lambda n: (0, 0)),
            pl.BlockSpec((Chid, 1), lambda n: (0, 0)),
            pl.BlockSpec((2, 1), lambda n: (0, 0)),
            pl.BlockSpec((2, M), lambda n: (0, 0)),
        ],
        out_specs=pl.BlockSpec((1, 2, M), lambda n: (n, 0, 0)),
        scratch_shapes=[pltpu.VMEM((9 * Cin, M), jnp.bfloat16)],
        compiler_params=pltpu.CompilerParams(
            dimension_semantics=("parallel",),
            vmem_limit_bytes=_pick_vmem_limit(),
        ),
    )(xb, w1_k, w2_k, b1_c, b2_c, cmask)

    # (N, 2, H*W) -> (N, 2, H, W): bit-compatible row-major reshape (free).
    return out_flat.reshape(N, 2, H, W)


def _reference(x_nchw, w1, b1, w2, b2):
    """Pure-JAX reference mirroring the kernel's precision policy
    (bf16 matmul operands, f32 accumulation)."""
    f32 = jnp.float32
    xb = x_nchw.astype(jnp.bfloat16).astype(f32)
    w1b = w1.astype(jnp.bfloat16).astype(f32)
    w2b = w2.astype(jnp.bfloat16).astype(f32)
    x = jnp.transpose(xb, (0, 2, 3, 1))
    dn = ("NHWC", "HWIO", "NHWC")
    h = lax.conv_general_dilated(
        x, w1b, window_strides=(1, 1), padding="SAME",
        dimension_numbers=dn, precision=lax.Precision.HIGHEST) + b1
    h = jnp.maximum(h, 0.0)
    hb = h.astype(jnp.bfloat16).astype(f32)
    o = lax.conv_general_dilated(
        hb, w2b, window_strides=(1, 1), padding="SAME",
        dimension_numbers=dn, precision=lax.Precision.HIGHEST) + b2
    return jnp.transpose(o, (0, 3, 1, 2))


if __name__ == "__main__":
    # Small shapes consistent with the module (input_dim -> hidden_dim -> 2).
    N, Cin, Chid, H, W = 2, 8, 16, 16, 16

    key = jax.random.PRNGKey(0)
    kx, k1, kb1, k2, kb2 = jax.random.split(key, 5)

    x = jax.random.normal(kx, (N, Cin, H, W), dtype=jnp.float32)
    # Parameter shapes from FlowHead.__init__ (stored HWIO here):
    #   conv1.weight: (Chid, Cin, 3, 3) -> (3, 3, Cin, Chid)
    #   conv2.weight: (2, Chid, 3, 3)   -> (3, 3, Chid, 2)
    w1 = jax.random.normal(k1, (3, 3, Cin, Chid), dtype=jnp.float32) * 0.1
    b1 = jax.random.normal(kb1, (Chid,), dtype=jnp.float32) * 0.1
    w2 = jax.random.normal(k2, (3, 3, Chid, 2), dtype=jnp.float32) * 0.1
    b2 = jax.random.normal(kb2, (2,), dtype=jnp.float32) * 0.1

    out = jax.block_until_ready(flow_head(x, w1, b1, w2, b2))
    ref = jax.block_until_ready(_reference(x, w1, b1, w2, b2))

    assert out.shape == (N, 2, H, W), out.shape
    max_err = float(jnp.max(jnp.abs(out - ref)))
    assert jnp.allclose(out, ref, atol=1e-2, rtol=1e-2), max_err

    print("KERNEL_OK")
</pallas_src>

<mosaic_0001>
module attributes {stable_mosaic.version = 11 : i64} {
  func.func @flow_head_kernel(%arg0: i32, %arg1: memref<1x8x256xbf16, #tpu.memory_space<vmem>>, %arg2: memref<16x72xbf16, #tpu.memory_space<vmem>>, %arg3: memref<18x16xbf16, #tpu.memory_space<vmem>>, %arg4: memref<16x1xf32, #tpu.memory_space<vmem>>, %arg5: memref<2x1xf32, #tpu.memory_space<vmem>>, %arg6: memref<2x256xf32, #tpu.memory_space<vmem>>, %arg7: memref<1x2x256xf32, #tpu.memory_space<vmem>>, %arg8: memref<72x256xbf16, #tpu.memory_space<vmem>>) attributes {dimension_semantics = [#tpu.dimension_semantics<parallel>], iteration_bounds = array<i64: 2>, scalar_prefetch = 0 : i64, scratch_operands = 1 : i64, tpu.core_type = #tpu.core_type<tc>, window_params = [{transform_indices = @transform_0, window_bounds = array<i64: 1, 8, 256>}, {pipeline_mode = #tpu.pipeline_mode<synchronous>, transform_indices = @transform_1, window_bounds = array<i64: 16, 72>}, {pipeline_mode = #tpu.pipeline_mode<synchronous>, transform_indices = @transform_2, window_bounds = array<i64: 18, 16>}, {pipeline_mode = #tpu.pipeline_mode<synchronous>, transform_indices = @transform_3, window_bounds = array<i64: 16, 1>}, {pipeline_mode = #tpu.pipeline_mode<synchronous>, transform_indices = @transform_4, window_bounds = array<i64: 2, 1>}, {pipeline_mode = #tpu.pipeline_mode<synchronous>, transform_indices = @transform_5, window_bounds = array<i64: 2, 256>}, {transform_indices = @transform_6, window_bounds = array<i64: 1, 2, 256>}]} {
    %c0 = arith.constant 0 : index
    %c0_0 = arith.constant 0 : index
    %c0_1 = arith.constant 0 : index
    %0 = vector.load %arg1[%c0, %c0_0, %c0_1] : memref<1x8x256xbf16, #tpu.memory_space<vmem>>, vector<1x8x256xbf16>
    %1 = vector.shape_cast %0 : vector<1x8x256xbf16> to vector<8x256xbf16>
    %c0_2 = arith.constant 0 : index
    %c0_3 = arith.constant 0 : index
    %2 = vector.load %arg6[%c0_2, %c0_3] : memref<2x256xf32, #tpu.memory_space<vmem>>, vector<2x256xf32>
    %3 = arith.truncf %2 : vector<2x256xf32> to vector<2x256xbf16>
    %cst = arith.constant 0.000000e+00 : bf16
    %4 = vector.broadcast %cst : bf16 to vector<8x17xbf16>
    %5 = vector.extract_strided_slice %1 {offsets = [0, 0], sizes = [8, 239], strides = [1, 1]} : vector<8x256xbf16> to vector<8x239xbf16>
    %6 = tpu.concatenate %4, %5 in 1 : vector<8x17xbf16>, vector<8x239xbf16> -> vector<8x256xbf16>
    %7 = vector.extract_strided_slice %3 {offsets = [0, 0], sizes = [1, 256], strides = [1, 1]} : vector<2x256xbf16> to vector<1x256xbf16>
    %8 = vector.broadcast %7 : vector<1x256xbf16> to vector<8x256xbf16>
    %9 = arith.mulf %6, %8 : vector<8x256xbf16>
    %c0_4 = arith.constant 0 : index
    %c0_5 = arith.constant 0 : index
    %10 = vector.load %arg8[%c0_4, %c0_5] : memref<72x256xbf16, #tpu.memory_space<vmem>>, vector<8x256xbf16>
    tpu.vector_store %arg8[%c0_4, %c0_5], %9 {strides = array<i32>} : memref<72x256xbf16, #tpu.memory_space<vmem>>, vector<8x256xbf16>,
    %cst_6 = arith.constant 0.000000e+00 : bf16
    %11 = vector.broadcast %cst_6 : bf16 to vector<8x16xbf16>
    %12 = vector.extract_strided_slice %1 {offsets = [0, 0], sizes = [8, 240], strides = [1, 1]} : vector<8x256xbf16> to vector<8x240xbf16>
    %13 = tpu.concatenate %11, %12 in 1 : vector<8x16xbf16>, vector<8x240xbf16> -> vector<8x256xbf16>
    %c8 = arith.constant 8 : index
    %c0_7 = arith.constant 0 : index
    %14 = vector.load %arg8[%c8, %c0_7] : memref<72x256xbf16, #tpu.memory_space<vmem>>, vector<8x256xbf16>
    tpu.vector_store %arg8[%c8, %c0_7], %13 {strides = array<i32>} : memref<72x256xbf16, #tpu.memory_space<vmem>>, vector<8x256xbf16>,
    %cst_8 = arith.constant 0.000000e+00 : bf16
    %15 = vector.broadcast %cst_8 : bf16 to vector<8x15xbf16>
    %16 = vector.extract_strided_slice %1 {offsets = [0, 0], sizes = [8, 241], strides = [1, 1]} : vector<8x256xbf16> to vector<8x241xbf16>
    %17 = tpu.concatenate %15, %16 in 1 : vector<8x15xbf16>, vector<8x241xbf16> -> vector<8x256xbf16>
    %18 = vector.extract_strided_slice %3 {offsets = [1, 0], sizes = [1, 256], strides = [1, 1]} : vector<2x256xbf16> to vector<1x256xbf16>
    %19 = vector.broadcast %18 : vector<1x256xbf16> to vector<8x256xbf16>
    %20 = arith.mulf %17, %19 : vector<8x256xbf16>
    %c16 = arith.constant 16 : index
    %c0_9 = arith.constant 0 : index
    %21 = vector.load %arg8[%c16, %c0_9] : memref<72x256xbf16, #tpu.memory_space<vmem>>, vector<8x256xbf16>
    tpu.vector_store %arg8[%c16, %c0_9], %20 {strides = array<i32>} : memref<72x256xbf16, #tpu.memory_space<vmem>>, vector<8x256xbf16>,
    %cst_10 = arith.constant 0.000000e+00 : bf16
    %22 = vector.broadcast %cst_10 : bf16 to vector<8x1xbf16>
    %23 = vector.extract_strided_slice %1 {offsets = [0, 0], sizes = [8, 255], strides = [1, 1]} : vector<8x256xbf16> to vector<8x255xbf16>
    %24 = tpu.concatenate %22, %23 in 1 : vector<8x1xbf16>, vector<8x255xbf16> -> vector<8x256xbf16>
    %25 = vector.extract_strided_slice %3 {offsets = [0, 0], sizes = [1, 256], strides = [1, 1]} : vector<2x256xbf16> to vector<1x256xbf16>
    %26 = vector.broadcast %25 : vector<1x256xbf16> to vector<8x256xbf16>
    %27 = arith.mulf %24, %26 : vector<8x256xbf16>
    %c24 = arith.constant 24 : index
    %c0_11 = arith.constant 0 : index
    %28 = vector.load %arg8[%c24, %c0_11] : memref<72x256xbf16, #tpu.memory_space<vmem>>, vector<8x256xbf16>
    tpu.vector_store %arg8[%c24, %c0_11], %27 {strides = array<i32>} : memref<72x256xbf16, #tpu.memory_space<vmem>>, vector<8x256xbf16>,
    %c32 = arith.constant 32 : index
    %c0_12 = arith.constant 0 : index
    %29 = vector.load %arg8[%c32, %c0_12] : memref<72x256xbf16, #tpu.memory_space<vmem>>, vector<8x256xbf16>
    tpu.vector_store %arg8[%c32, %c0_12], %1 {strides = array<i32>} : memref<72x256xbf16, #tpu.memory_space<vmem>>, vector<8x256xbf16>,
    %cst_13 = arith.constant 0.000000e+00 : bf16
    %30 = vector.broadcast %cst_13 : bf16 to vector<8x1xbf16>
    %31 = vector.extract_strided_slice %1 {offsets = [0, 1], sizes = [8, 255], strides = [1, 1]} : vector<8x256xbf16> to vector<8x255xbf16>
    %32 = tpu.concatenate %31, %30 in 1 : vector<8x255xbf16>, vector<8x1xbf16> -> vector<8x256xbf16>
    %33 = vector.extract_strided_slice %3 {offsets = [1, 0], sizes = [1, 256], strides = [1, 1]} : vector<2x256xbf16> to vector<1x256xbf16>
    %34 = vector.broadcast %33 : vector<1x256xbf16> to vector<8x256xbf16>
    %35 = arith.mulf %32, %34 : vector<8x256xbf16>
    %c40 = arith.constant 40 : index
    %c0_14 = arith.constant 0 : index
    %36 = vector.load %arg8[%c40, %c0_14] : memref<72x256xbf16, #tpu.memory_space<vmem>>, vector<8x256xbf16>
    tpu.vector_store %arg8[%c40, %c0_14], %35 {strides = array<i32>} : memref<72x256xbf16, #tpu.memory_space<vmem>>, vector<8x256xbf16>,
    %cst_15 = arith.constant 0.000000e+00 : bf16
    %37 = vector.broadcast %cst_15 : bf16 to vector<8x15xbf16>
    %38 = vector.extract_strided_slice %1 {offsets = [0, 15], sizes = [8, 241], strides = [1, 1]} : vector<8x256xbf16> to vector<8x241xbf16>
    %39 = tpu.concatenate %38, %37 in 1 : vector<8x241xbf16>, vector<8x15xbf16> -> vector<8x256xbf16>
    %40 = vector.extract_strided_slice %3 {offsets = [0, 0], sizes = [1, 256], strides = [1, 1]} : vector<2x256xbf16> to vector<1x256xbf16>
    %41 = vector.broadcast %40 : vector<1x256xbf16> to vector<8x256xbf16>
    %42 = arith.mulf %39, %41 : vector<8x256xbf16>
    %c48 = arith.constant 48 : index
    %c0_16 = arith.constant 0 : index
    %43 = vector.load %arg8[%c48, %c0_16] : memref<72x256xbf16, #tpu.memory_space<vmem>>, vector<8x256xbf16>
    tpu.vector_store %arg8[%c48, %c0_16], %42 {strides = array<i32>} : memref<72x256xbf16, #tpu.memory_space<vmem>>, vector<8x256xbf16>,
    %cst_17 = arith.constant 0.000000e+00 : bf16
    %44 = vector.broadcast %cst_17 : bf16 to vector<8x16xbf16>
    %45 = vector.extract_strided_slice %1 {offsets = [0, 16], sizes = [8, 240], strides = [1, 1]} : vector<8x256xbf16> to vector<8x240xbf16>
    %46 = tpu.concatenate %45, %44 in 1 : vector<8x240xbf16>, vector<8x16xbf16> -> vector<8x256xbf16>
    %c56 = arith.constant 56 : index
    %c0_18 = arith.constant 0 : index
    %47 = vector.load %arg8[%c56, %c0_18] : memref<72x256xbf16, #tpu.memory_space<vmem>>, vector<8x256xbf16>
    tpu.vector_store %arg8[%c56, %c0_18], %46 {strides = array<i32>} : memref<72x256xbf16, #tpu.memory_space<vmem>>, vector<8x256xbf16>,
    %cst_19 = arith.constant 0.000000e+00 : bf16
    %48 = vector.broadcast %cst_19 : bf16 to vector<8x17xbf16>
    %49 = vector.extract_strided_slice %1 {offsets = [0, 17], sizes = [8, 239], strides = [1, 1]} : vector<8x256xbf16> to vector<8x239xbf16>
    %50 = tpu.concatenate %49, %48 in 1 : vector<8x239xbf16>, vector<8x17xbf16> -> vector<8x256xbf16>
    %51 = vector.extract_strided_slice %3 {offsets = [1, 0], sizes = [1, 256], strides = [1, 1]} : vector<2x256xbf16> to vector<1x256xbf16>
    %52 = vector.broadcast %51 : vector<1x256xbf16> to vector<8x256xbf16>
    %53 = arith.mulf %50, %52 : vector<8x256xbf16>
    %c64 = arith.constant 64 : index
    %c0_20 = arith.constant 0 : index
    %54 = vector.load %arg8[%c64, %c0_20] : memref<72x256xbf16, #tpu.memory_space<vmem>>, vector<8x256xbf16>
    tpu.vector_store %arg8[%c64, %c0_20], %53 {strides = array<i32>} : memref<72x256xbf16, #tpu.memory_space<vmem>>, vector<8x256xbf16>,
    %c0_21 = arith.constant 0 : index
    %c0_22 = arith.constant 0 : index
    %55 = vector.load %arg2[%c0_21, %c0_22] : memref<16x72xbf16, #tpu.memory_space<vmem>>, vector<16x72xbf16>
    %c0_23 = arith.constant 0 : index
    %c0_24 = arith.constant 0 : index
    %56 = vector.load %arg8[%c0_23, %c0_24] : memref<72x256xbf16, #tpu.memory_space<vmem>>, vector<72x256xbf16>
    %cst_25 = arith.constant dense<0.000000e+00> : vector<16x256xf32>
    %57 = tpu.matmul %55, %56, %cst_25 {dimension_numbers = #tpu.dot_dimension_numbers<[1], [0], [0], [1], [0, 0, 1, 1], [], []>} : vector<16x72xbf16>, vector<72x256xbf16>, vector<16x256xf32> -> vector<16x256xf32>
    %c0_26 = arith.constant 0 : index
    %c0_27 = arith.constant 0 : index
    %58 = vector.load %arg4[%c0_26, %c0_27] : memref<16x1xf32, #tpu.memory_space<vmem>>, vector<16x1xf32>
    %59 = vector.broadcast %58 : vector<16x1xf32> to vector<16x256xf32>
    %60 = arith.addf %57, %59 : vector<16x256xf32>
    %cst_28 = arith.constant 0.000000e+00 : f32
    %61 = vector.broadcast %cst_28 : f32 to vector<16x256xf32>
    %62 = arith.maximumf %60, %61 : vector<16x256xf32>
    %63 = arith.truncf %62 : vector<16x256xf32> to vector<16x256xbf16>
    %c0_29 = arith.constant 0 : index
    %c0_30 = arith.constant 0 : index
    %64 = vector.load %arg3[%c0_29, %c0_30] : memref<18x16xbf16, #tpu.memory_space<vmem>>, vector<18x16xbf16>
    %cst_31 = arith.constant dense<0.000000e+00> : vector<18x256xf32>
    %65 = tpu.matmul %64, %63, %cst_31 {dimension_numbers = #tpu.dot_dimension_numbers<[1], [0], [0], [1], [0, 0, 1, 1], [], []>} : vector<18x16xbf16>, vector<16x256xbf16>, vector<18x256xf32> -> vector<18x256xf32>
    %cst_32 = arith.constant 0.000000e+00 : f32
    %66 = vector.broadcast %cst_32 : f32 to vector<2x256xf32>
    %67 = vector.extract_strided_slice %65 {offsets = [0, 0], sizes = [2, 256], strides = [1, 1]} : vector<18x256xf32> to vector<2x256xf32>
    %cst_33 = arith.constant 0.000000e+00 : f32
    %68 = vector.broadcast %cst_33 : f32 to vector<2x17xf32>
    %69 = vector.extract_strided_slice %67 {offsets = [0, 0], sizes = [2, 239], strides = [1, 1]} : vector<2x256xf32> to vector<2x239xf32>
    %70 = tpu.concatenate %68, %69 in 1 : vector<2x17xf32>, vector<2x239xf32> -> vector<2x256xf32>
    %71 = vector.extract_strided_slice %2 {offsets = [0, 0], sizes = [1, 256], strides = [1, 1]} : vector<2x256xf32> to vector<1x256xf32>
    %72 = vector.broadcast %71 : vector<1x256xf32> to vector<2x256xf32>
    %73 = arith.mulf %70, %72 : vector<2x256xf32>
    %74 = arith.addf %66, %73 : vector<2x256xf32>
    %75 = vector.extract_strided_slice %65 {offsets = [2, 0], sizes = [2, 256], strides = [1, 1]} : vector<18x256xf32> to vector<2x256xf32>
    %cst_34 = arith.constant 0.000000e+00 : f32
    %76 = vector.broadcast %cst_34 : f32 to vector<2x16xf32>
    %77 = vector.extract_strided_slice %75 {offsets = [0, 0], sizes = [2, 240], strides = [1, 1]} : vector<2x256xf32> to vector<2x240xf32>
    %78 = tpu.concatenate %76, %77 in 1 : vector<2x16xf32>, vector<2x240xf32> -> vector<2x256xf32>
    %79 = arith.addf %74, %78 : vector<2x256xf32>
    %80 = vector.extract_strided_slice %65 {offsets = [4, 0], sizes = [2, 256], strides = [1, 1]} : vector<18x256xf32> to vector<2x256xf32>
    %cst_35 = arith.constant 0.000000e+00 : f32
    %81 = vector.broadcast %cst_35 : f32 to vector<2x15xf32>
    %82 = vector.extract_strided_slice %80 {offsets = [0, 0], sizes = [2, 241], strides = [1, 1]} : vector<2x256xf32> to vector<2x241xf32>
    %83 = tpu.concatenate %81, %82 in 1 : vector<2x15xf32>, vector<2x241xf32> -> vector<2x256xf32>
    %84 = vector.extract_strided_slice %2 {offsets = [1, 0], sizes = [1, 256], strides = [1, 1]} : vector<2x256xf32> to vector<1x256xf32>
    %85 = vector.broadcast %84 : vector<1x256xf32> to vector<2x256xf32>
    %86 = arith.mulf %83, %85 : vector<2x256xf32>
    %87 = arith.addf %79, %86 : vector<2x256xf32>
    %88 = vector.extract_strided_slice %65 {offsets = [6, 0], sizes = [2, 256], strides = [1, 1]} : vector<18x256xf32> to vector<2x256xf32>
    %cst_36 = arith.constant 0.000000e+00 : f32
    %89 = vector.broadcast %cst_36 : f32 to vector<2x1xf32>
    %90 = vector.extract_strided_slice %88 {offsets = [0, 0], sizes = [2, 255], strides = [1, 1]} : vector<2x256xf32> to vector<2x255xf32>
    %91 = tpu.concatenate %89, %90 in 1 : vector<2x1xf32>, vector<2x255xf32> -> vector<2x256xf32>
    %92 = vector.extract_strided_slice %2 {offsets = [0, 0], sizes = [1, 256], strides = [1, 1]} : vector<2x256xf32> to vector<1x256xf32>
    %93 = vector.broadcast %92 : vector<1x256xf32> to vector<2x256xf32>
    %94 = arith.mulf %91, %93 : vector<2x256xf32>
    %95 = arith.addf %87, %94 : vector<2x256xf32>
    %96 = vector.extract_strided_slice %65 {offsets = [8, 0], sizes = [2, 256], strides = [1, 1]} : vector<18x256xf32> to vector<2x256xf32>
    %97 = arith.addf %95, %96 : vector<2x256xf32>
    %98 = vector.extract_strided_slice %65 {offsets = [10, 0], sizes = [2, 256], strides = [1, 1]} : vector<18x256xf32> to vector<2x256xf32>
    %cst_37 = arith.constant 0.000000e+00 : f32
    %99 = vector.broadcast %cst_37 : f32 to vector<2x1xf32>
    %100 = vector.extract_strided_slice %98 {offsets = [0, 1], sizes = [2, 255], strides = [1, 1]} : vector<2x256xf32> to vector<2x255xf32>
    %101 = tpu.concatenate %100, %99 in 1 : vector<2x255xf32>, vector<2x1xf32> -> vector<2x256xf32>
    %102 = vector.extract_strided_slice %2 {offsets = [1, 0], sizes = [1, 256], strides = [1, 1]} : vector<2x256xf32> to vector<1x256xf32>
    %103 = vector.broadcast %102 : vector<1x256xf32> to vector<2x256xf32>
    %104 = arith.mulf %101, %103 : vector<2x256xf32>
    %105 = arith.addf %97, %104 : vector<2x256xf32>
    %106 = vector.extract_strided_slice %65 {offsets = [12, 0], sizes = [2, 256], strides = [1, 1]} : vector<18x256xf32> to vector<2x256xf32>
    %cst_38 = arith.constant 0.000000e+00 : f32
    %107 = vector.broadcast %cst_38 : f32 to vector<2x15xf32>
    %108 = vector.extract_strided_slice %106 {offsets = [0, 15], sizes = [2, 241], strides = [1, 1]} : vector<2x256xf32> to vector<2x241xf32>
    %109 = tpu.concatenate %108, %107 in 1 : vector<2x241xf32>, vector<2x15xf32> -> vector<2x256xf32>
    %110 = vector.extract_strided_slice %2 {offsets = [0, 0], sizes = [1, 256], strides = [1, 1]} : vector<2x256xf32> to vector<1x256xf32>
    %111 = vector.broadcast %110 : vector<1x256xf32> to vector<2x256xf32>
    %112 = arith.mulf %109, %111 : vector<2x256xf32>
    %113 = arith.addf %105, %112 : vector<2x256xf32>
    %114 = vector.extract_strided_slice %65 {offsets = [14, 0], sizes = [2, 256], strides = [1, 1]} : vector<18x256xf32> to vector<2x256xf32>
    %cst_39 = arith.constant 0.000000e+00 : f32
    %115 = vector.broadcast %cst_39 : f32 to vector<2x16xf32>
    %116 = vector.extract_strided_slice %114 {offsets = [0, 16], sizes = [2, 240], strides = [1, 1]} : vector<2x256xf32> to vector<2x240xf32>
    %117 = tpu.concatenate %116, %115 in 1 : vector<2x240xf32>, vector<2x16xf32> -> vector<2x256xf32>
    %118 = arith.addf %113, %117 : vector<2x256xf32>
    %119 = vector.extract_strided_slice %65 {offsets = [16, 0], sizes = [2, 256], strides = [1, 1]} : vector<18x256xf32> to vector<2x256xf32>
    %cst_40 = arith.constant 0.000000e+00 : f32
    %120 = vector.broadcast %cst_40 : f32 to vector<2x17xf32>
    %121 = vector.extract_strided_slice %119 {offsets = [0, 17], sizes = [2, 239], strides = [1, 1]} : vector<2x256xf32> to vector<2x239xf32>
    %122 = tpu.concatenate %121, %120 in 1 : vector<2x239xf32>, vector<2x17xf32> -> vector<2x256xf32>
    %123 = vector.extract_strided_slice %2 {offsets = [1, 0], sizes = [1, 256], strides = [1, 1]} : vector<2x256xf32> to vector<1x256xf32>
    %124 = vector.broadcast %123 : vector<1x256xf32> to vector<2x256xf32>
    %125 = arith.mulf %122, %124 : vector<2x256xf32>
    %126 = arith.addf %118, %125 : vector<2x256xf32>
    %c0_41 = arith.constant 0 : index
    %c0_42 = arith.constant 0 : index
    %127 = vector.load %arg5[%c0_41, %c0_42] : memref<2x1xf32, #tpu.memory_space<vmem>>, vector<2x1xf32>
    %128 = vector.broadcast %127 : vector<2x1xf32> to vector<2x256xf32>
    %129 = arith.addf %126, %128 : vector<2x256xf32>
    %130 = vector.shape_cast %129 : vector<2x256xf32> to vector<1x2x256xf32>
    %c0_43 = arith.constant 0 : index
    %c0_44 = arith.constant 0 : index
    %c0_45 = arith.constant 0 : index
    %131 = vector.load %arg7[%c0_43, %c0_44, %c0_45] : memref<1x2x256xf32, #tpu.memory_space<vmem>>, vector<1x2x256xf32>
    tpu.vector_store %arg7[%c0_43, %c0_44, %c0_45], %130 {strides = array<i32>} : memref<1x2x256xf32, #tpu.memory_space<vmem>>, vector<1x2x256xf32>,
    return
  }
  func.func @transform_0(%arg0: i32) -> (i32, i32, i32) {
    %c0_i32 = arith.constant 0 : i32
    %c0_i32_0 = arith.constant 0 : i32
    %c0_i32_1 = arith.constant 0 : i32
    return %arg0, %c0_i32, %c0_i32_0 : i32, i32, i32
  }
  func.func @transform_1(%arg0: i32) -> (i32, i32) {
    %c0_i32 = arith.constant 0 : i32
    %c0_i32_0 = arith.constant 0 : i32
    %c0_i32_1 = arith.constant 0 : i32
    return %c0_i32, %c0_i32_0 : i32, i32
  }
  func.func @transform_2(%arg0: i32) -> (i32, i32) {
    %c0_i32 = arith.constant 0 : i32
    %c0_i32_0 = arith.constant 0 : i32
    %c0_i32_1 = arith.constant 0 : i32
    return %c0_i32, %c0_i32_0 : i32, i32
  }
  func.func @transform_3(%arg0: i32) -> (i32, i32) {
    %c0_i32 = arith.constant 0 : i32
    %c0_i32_0 = arith.constant 0 : i32
    %c0_i32_1 = arith.constant 0 : i32
    return %c0_i32, %c0_i32_0 : i32, i32
  }
  func.func @transform_4(%arg0: i32) -> (i32, i32) {
    %c0_i32 = arith.constant 0 : i32
    %c0_i32_0 = arith.constant 0 : i32
    %c0_i32_1 = arith.constant 0 : i32
    return %c0_i32, %c0_i32_0 : i32, i32
  }
  func.func @transform_5(%arg0: i32) -> (i32, i32) {
    %c0_i32 = arith.constant 0 : i32
    %c0_i32_0 = arith.constant 0 : i32
    %c0_i32_1 = arith.constant 0 : i32
    return %c0_i32, %c0_i32_0 : i32, i32
  }
  func.func @transform_6(%arg0: i32) -> (i32, i32, i32) {
    %c0_i32 = arith.constant 0 : i32
    %c0_i32_0 = arith.constant 0 : i32
    %c0_i32_1 = arith.constant 0 : i32
    return %arg0, %c0_i32, %c0_i32_0 : i32, i32, i32
  }
}

</mosaic_0001>

<llo_original>
// kernel: tpu_custom_call.1
$region0: #{tpu_custom_call.1}
  #allocation0 [shape = 'u32[]', space=smem, size = 0x4, offset = 0x4, fixed_abs, tag = 'smem constant byte address 0x4 - core index']
  #allocation1 [shape = 'u32[144,128]{1,0:T(1,128)}', space=vmem, size = 0x12000, scoped, tag = 'internal scratch']
  #allocation2 [shape = 'bf16[72,256]{1,0:T(8,128)(2,1)}', space=vmem, size = 0x9000, scoped, tag = 'scratch operand']
  %s0 = inlined_call_operand.vmem [shape: bf16[2,8,256], index: 0, kind: input, shape index: {}]
  %s1 = inlined_call_operand.vmem [shape: bf16[16,72], index: 1, kind: input, shape index: {}]
  %s2 = inlined_call_operand.vmem [shape: bf16[18,16], index: 2, kind: input, shape index: {}]
  %s3 = inlined_call_operand.vmem [shape: f32[16,1], index: 3, kind: input, shape index: {}]
  %s4 = inlined_call_operand.vmem [shape: f32[2,1], index: 4, kind: input, shape index: {}]
  %s5 = inlined_call_operand.vmem [shape: f32[2,256], index: 5, kind: input, shape index: {}]
  %s6 = inlined_call_operand.hbm [shape: f32[2,2,256], index: 6, kind: output, shape index: {}]
  %s7 = sld [smem:[#allocation0]]
  $region57: #{tpu_custom_call.1} parent=0
    _
  %s9 = ssub.s32 1, %s7
  %s10 = scalar_select 0, %s9, %s7
  $region1: #{tpu_custom_call.1} parent=0
    #allocation3 [shape = 'u8[4096]{0}', space=vmem, size = 0x1000, scoped, tag = 'output window, operand 0']
    #allocation4 [shape = 's32[2]{0}', space=sflag, size = 0x8, scoped, tag = 'scoped memory for tpu_custom_call.1']
    %11 = vsyncpa [#allocation4], 0
    %s12 = scalar_lea.sflag [#allocation4], 1
    %13 = vsyncpa %s12, 0
    loop: start=0, step=1, limit=4
    $region2: #{tpu_custom_call.1} parent=1 // loop_pre_header
      _
    $region3: #{tpu_custom_call.1} parent=1 // loop_header
      %s15 = sphi 0, %s19
      %p16 = scmp.ge.s32.totalorder %s15, 4
      %s25 = sphi 0, %s27
      %s28 = sphi 0, %s25
      %s29 = sphi 0, %s28
      %s45 = sphi 0, %s29
      %s49 = sphi 0, %s49
      %s51 = sphi 0, %s49
      %s52 = sphi 0, %s51
      %s66 = sphi 0, %s52
      %s70 = sphi 0, %s70
      %s72 = sphi 0, %s70
      %s73 = sphi 0, %s72
      %s87 = sphi 0, %s73
      %s91 = sphi 0, %s91
      %s93 = sphi 0, %s91
      %s94 = sphi 0, %s93
      %s108 = sphi 0, %s94
      %s112 = sphi 0, %s112
      %s114 = sphi 0, %s112
      %s115 = sphi 0, %s114
      %s129 = sphi 0, %s115
      %s133 = sphi 0, %s133
      %s135 = sphi 0, %s133
      %s136 = sphi 0, %s135
      %s150 = sphi 0, %s136
      %s156 = sphi 0, %s158
      %s159 = sphi 0, %s156
      %s160 = sphi 0, %s159
      %s176 = sphi 0, %s160
    $region4: #{tpu_custom_call.1} parent=1 // loop_header_branch
      %18 = sbr.rel (%p16) target = $region8
    $region5: #{tpu_custom_call.1} parent=1 // loop_body
      %s20 = ssub.s32 %s15, 1
      %s21 = ssub.s32 %s15, 2
      %s22 = sadd.s32 %s15, 1
      %s23 = ssub.s32 %s15, %s22
      %p24 = scmp.eq.s32.totalorder %s23, 0
      %s26 = sadd.s32 %s25, 1
      %s27 = scalar_select %p24, %s25, %s26
      %p30 = pneg %p24
      %p31 = scmp.eq.s32.totalorder %s15, 1
      %p32 = por %p30, %p31
      %p33 = scmp.ne.s32.totalorder %s25, %s28
      %p34 = scmp.eq.s32.totalorder %s15, 0
      %p35 = por %p33, %p34
      %p36 = scmp.ne.s32.totalorder %s25, %s28
      %p37 = scmp.eq.s32.totalorder %s20, 1
      %p38 = por %p36, %p37
      %p39 = scmp.ne.s32.totalorder %s28, %s29
      %p40 = scmp.eq.s32.totalorder %s20, 0
      %p41 = por %p39, %p40
      %p42 = scmp.ne.s32.totalorder %s28, %s29
      %p43 = scmp.eq.s32.totalorder %s21, 1
      %p44 = por %p42, %p43
      %p46 = scmp.ne.s32.totalorder %s29, %s45
      %p47 = scmp.eq.s32.totalorder %s21, 0
      %p48 = por %p46, %p47
      %s50 = sadd.s32 %s49, 1
      %p53 = scmp.eq.s32.totalorder %s15, 1
      %p54 = scmp.ne.s32.totalorder %s49, %s51
      %p55 = scmp.eq.s32.totalorder %s15, 0
      %p56 = por %p54, %p55
      %p57 = scmp.ne.s32.totalorder %s49, %s51
      %p58 = scmp.eq.s32.totalorder %s20, 1
      %p59 = por %p57, %p58
      %p60 = scmp.ne.s32.totalorder %s51, %s52
      %p61 = scmp.eq.s32.totalorder %s20, 0
      %p62 = por %p60, %p61
      %p63 = scmp.ne.s32.totalorder %s51, %s52
      %p64 = scmp.eq.s32.totalorder %s21, 1
      %p65 = por %p63, %p64
      %p67 = scmp.ne.s32.totalorder %s52, %s66
      %p68 = scmp.eq.s32.totalorder %s21, 0
      %p69 = por %p67, %p68
      %s71 = sadd.s32 %s70, 1
      %p74 = scmp.eq.s32.totalorder %s15, 1
      %p75 = scmp.ne.s32.totalorder %s70, %s72
      %p76 = scmp.eq.s32.totalorder %s15, 0
      %p77 = por %p75, %p76
      %p78 = scmp.ne.s32.totalorder %s70, %s72
      %p79 = scmp.eq.s32.totalorder %s20, 1
      %p80 = por %p78, %p79
      %p81 = scmp.ne.s32.totalorder %s72, %s73
      %p82 = scmp.eq.s32.totalorder %s20, 0
      %p83 = por %p81, %p82
      %p84 = scmp.ne.s32.totalorder %s72, %s73
      %p85 = scmp.eq.s32.totalorder %s21, 1
      %p86 = por %p84, %p85
      %p88 = scmp.ne.s32.totalorder %s73, %s87
      %p89 = scmp.eq.s32.totalorder %s21, 0
      %p90 = por %p88, %p89
      %s92 = sadd.s32 %s91, 1
      %p95 = scmp.eq.s32.totalorder %s15, 1
      %p96 = scmp.ne.s32.totalorder %s91, %s93
      %p97 = scmp.eq.s32.totalorder %s15, 0
      %p98 = por %p96, %p97
      %p99 = scmp.ne.s32.totalorder %s91, %s93
      %p100 = scmp.eq.s32.totalorder %s20, 1
      %p101 = por %p99, %p100
      %p102 = scmp.ne.s32.totalorder %s93, %s94
      %p103 = scmp.eq.s32.totalorder %s20, 0
      %p104 = por %p102, %p103
      %p105 = scmp.ne.s32.totalorder %s93, %s94
      %p106 = scmp.eq.s32.totalorder %s21, 1
      %p107 = por %p105, %p106
      %p109 = scmp.ne.s32.totalorder %s94, %s108
      %p110 = scmp.eq.s32.totalorder %s21, 0
      %p111 = por %p109, %p110
      %s113 = sadd.s32 %s112, 1
      %p116 = scmp.eq.s32.totalorder %s15, 1
      %p117 = scmp.ne.s32.totalorder %s112, %s114
      %p118 = scmp.eq.s32.totalorder %s15, 0
      %p119 = por %p117, %p118
      %p120 = scmp.ne.s32.totalorder %s112, %s114
      %p121 = scmp.eq.s32.totalorder %s20, 1
      %p122 = por %p120, %p121
      %p123 = scmp.ne.s32.totalorder %s114, %s115
      %p124 = scmp.eq.s32.totalorder %s20, 0
      %p125 = por %p123, %p124
      %p126 = scmp.ne.s32.totalorder %s114, %s115
      %p127 = scmp.eq.s32.totalorder %s21, 1
      %p128 = por %p126, %p127
      %p130 = scmp.ne.s32.totalorder %s115, %s129
      %p131 = scmp.eq.s32.totalorder %s21, 0
      %p132 = por %p130, %p131
      %s134 = sadd.s32 %s133, 1
      %p137 = scmp.eq.s32.totalorder %s15, 1
      %p138 = scmp.ne.s32.totalorder %s133, %s135
      %p139 = scmp.eq.s32.totalorder %s15, 0
      %p140 = por %p138, %p139
      %p141 = scmp.ne.s32.totalorder %s133, %s135
      %p142 = scmp.eq.s32.totalorder %s20, 1
      %p143 = por %p141, %p142
      %p144 = scmp.ne.s32.totalorder %s135, %s136
      %p145 = scmp.eq.s32.totalorder %s20, 0
      %p146 = por %p144, %p145
      %p147 = scmp.ne.s32.totalorder %s135, %s136
      %p148 = scmp.eq.s32.totalorder %s21, 1
      %p149 = por %p147, %p148
      %p151 = scmp.ne.s32.totalorder %s136, %s150
      %p152 = scmp.eq.s32.totalorder %s21, 0
      %p153 = por %p151, %p152
      %s154 = ssub.s32 %s15, %s22
      %p155 = scmp.eq.s32.totalorder %s154, 0
      %s157 = sadd.s32 %s156, 1
      %s158 = scalar_select %p155, %s156, %s157
      %p161 = pneg %p155
      %p162 = scmp.eq.s32.totalorder %s15, 1
      %p163 = por %p161, %p162
      %p164 = scmp.ne.s32.totalorder %s156, %s159
      %p165 = scmp.eq.s32.totalorder %s15, 0
      %p166 = por %p164, %p165
      %p167 = scmp.ne.s32.totalorder %s156, %s159
      %p168 = scmp.eq.s32.totalorder %s20, 1
      %p169 = por %p167, %p168
      %p170 = scmp.ne.s32.totalorder %s159, %s160
      %p171 = scmp.eq.s32.totalorder %s20, 0
      %p172 = por %p170, %p171
      %p173 = scmp.ne.s32.totalorder %s159, %s160
      %p174 = scmp.eq.s32.totalorder %s21, 1
      %p175 = por %p173, %p174
      %p177 = scmp.ne.s32.totalorder %s160, %s176
      %p178 = scmp.eq.s32.totalorder %s21, 0
      %p179 = por %p177, %p178
      %p180 = scmp.le.s32.totalorder 1, %s15
      %p181 = scmp.lt.s32.totalorder %s15, 3
      %p182 = pnand %p180, %p181
      %p183 = pneg %p182
      // Predicated region
      $region9: #{tpu_custom_call.1} parent=5 // pred_check
        _
      $region10: #{tpu_custom_call.1} parent=5 // pred_check_branch
        %185 = sbr.rel (%p182) target = $region12
      $region11: #{tpu_custom_call.1} parent=5 // pred_region
        %s186 = ssub.s32 %s15, 1
        // Predicated region
        $region13: #{tpu_custom_call.1} parent=11 // pred_check
          %p187 = pneg %p62
        $region14: #{tpu_custom_call.1} parent=11 // pred_check_branch
          %189 = sbr.rel (%p187) target = $region16
        $region15: #{tpu_custom_call.1} parent=11 // pred_region
          _
        $region16: #{tpu_custom_call.1} parent=11 // pred_fallthru
          _
        // Predicated region
        $region17: #{tpu_custom_call.1} parent=11 // pred_check
          %p190 = pneg %p83
        $region18: #{tpu_custom_call.1} parent=11 // pred_check_branch
          %192 = sbr.rel (%p190) target = $region20
        $region19: #{tpu_custom_call.1} parent=11 // pred_region
          _
        $region20: #{tpu_custom_call.1} parent=11 // pred_fallthru
          _
        // Predicated region
        $region21: #{tpu_custom_call.1} parent=11 // pred_check
          %p193 = pneg %p104
        $region22: #{tpu_custom_call.1} parent=11 // pred_check_branch
          %195 = sbr.rel (%p193) target = $region24
        $region23: #{tpu_custom_call.1} parent=11 // pred_region
          _
        $region24: #{tpu_custom_call.1} parent=11 // pred_fallthru
          _
        // Predicated region
        $region25: #{tpu_custom_call.1} parent=11 // pred_check
          %p196 = pneg %p125
        $region26: #{tpu_custom_call.1} parent=11 // pred_check_branch
          %198 = sbr.rel (%p196) target = $region28
        $region27: #{tpu_custom_call.1} parent=11 // pred_region
          _
        $region28: #{tpu_custom_call.1} parent=11 // pred_fallthru
          _
        // Predicated region
        $region29: #{tpu_custom_call.1} parent=11 // pred_check
          %p199 = pneg %p146
        $region30: #{tpu_custom_call.1} parent=11 // pred_check_branch
          %201 = sbr.rel (%p199) target = $region32
        $region31: #{tpu_custom_call.1} parent=11 // pred_region
          _
        $region32: #{tpu_custom_call.1} parent=11 // pred_fallthru
          _
      $region12: #{tpu_custom_call.1} parent=5 // pred_fallthru
        _
      %p202 = scmp.lt.s32.totalorder %s15, 2
      // Predicated region
      $region33: #{tpu_custom_call.1} parent=5 // pred_check
        %p203 = pneg %p202
      $region34: #{tpu_custom_call.1} parent=5 // pred_check_branch
        %205 = sbr.rel (%p203) target = $region36
      $region35: #{tpu_custom_call.1} parent=5 // pred_region
        // Predicated region
        $region37: #{tpu_custom_call.1} parent=35 // pred_check
          %p206 = pneg %p35
        $region38: #{tpu_custom_call.1} parent=35 // pred_check_branch
          %208 = sbr.rel (%p206) target = $region40
        $region39: #{tpu_custom_call.1} parent=35 // pred_region
          %p209 = scmp.lt.s32.totalorder %s15, 1
          %s210 = scalar_select %p209, %s15, 1
          %s211 = smul.addr %s210, 2
          %s212 = smul.addr %s211, 4
          %s213 = scalar_lea.vmem %s0, %s212
        $region40: #{tpu_custom_call.1} parent=35 // pred_fallthru
          _
      $region36: #{tpu_custom_call.1} parent=5 // pred_fallthru
        _
      %p214 = scmp.le.s32.totalorder 1, %s15
      %p215 = scmp.lt.s32.totalorder %s15, 3
      %p216 = pnand %p214, %p215
      %p217 = pneg %p216
      // Predicated region
      $region41: #{tpu_custom_call.1} parent=5 // pred_check
        _
      $region42: #{tpu_custom_call.1} parent=5 // pred_check_branch
        %219 = sbr.rel (%p216) target = $region44
      $region43: #{tpu_custom_call.1} parent=5 // pred_region
        %s220 = ssub.s32 %s15, 1
        %p221 = scmp.lt.s32.totalorder %s20, 1
        %s222 = scalar_select %p221, %s20, 1
        %s223 = smul.addr %s222, 2
        %s224 = smul.addr %s223, 4
        %s225 = scalar_lea.vmem %s0, %s224
        %p226 = pneg %p41
        %p227 = pneg %p38
        %p228 = pneg %p62
        %p229 = pneg %p59
        %p230 = pneg %p83
        %p231 = pneg %p80
        %p232 = pneg %p104
        %p233 = pneg %p101
        %p234 = pneg %p125
        %p235 = pneg %p122
        %p236 = pneg %p146
        %p237 = pneg %p143
        %p238 = pneg %p172
        %p239 = pneg %p169
        %s240 = sand.u32 %s159, 1
        %s241 = scalar_lea.sflag [#allocation4], %s240
        %s242 = sand.u32 %s159, 1
        %s243 = smul.addr %s242, 4
        %s244 = scalar_lea.vmem [#allocation3], %s243
        %p245 = scmp.lt.s32.totalorder %s20, 1
        %s246 = scalar_select %p245, %s20, 1
        %s247 = smul.addr %s246, 2
        %s248 = smul.addr %s247, 4
        %s249 = scalar_lea.vmem %s0, %s248
        %v251 = vld [vmem:[%s249] sm:$0xff]
        %v252 = vld [vmem:[%s5] sm:$0xf]
        %v255 = vunpack.c.l.s4 1983009808
        %v256 = vunpack.c.0.s8 %v255
        %v257 = vlaneseq
        %v258 = vshrl.u32 %v257, 7
        %v259 = vsub.s32 %v256, %v258
        %v260 = vrot.slane %v252, %v259
        %v261 = vcombine.high %v260, %v260
        %v264 = vpack.c.bf16 %v260, %v260
        %v265 = vpack.c.bf16 %v261, %v261
        %v267 = vunpack.c.l.b16 %v251
        %v268 = vunpack.c.h.b16 %v251
        %v269 = vpack.c.b16 %v267, %v267
        %v270 = vpack.c.b16 %v268, %v268
        %271 = vrot.lane.b32.xlu0 %v269, 17
        %v272 = vpop.permute.xlu0 %271
        %273 = vrot.lane.b32.xlu0 %v270, 17
        %v274 = vpop.permute.xlu0 %273
        %vm275 = vcmask 138240
        %v276 = vsel %vm275, %v272, %v274
        %vm278 = vcmask 138240
        %v281 = vsel %vm278, 0, %v272
        %v284 = vpack.i.b16 %v264, %v264
        %v286 = vlaneseq
        %v287 = vshrl.u32 %v286, 7
        %v288 = vsub.s32 0, %v287
        %v289 = vrot.slane %v284, %v288
        %v291 = vpack.i.b16 %v265, %v265
        %v293 = vlaneseq
        %v294 = vshrl.u32 %v293, 7
        %v295 = vsub.s32 0, %v294
        %v296 = vrot.slane %v291, %v295
        %v297 = vmul.bf16 %v281, %v289
        %v298 = vmul.bf16 %v276, %v296
        %v301 = vunpack.c.l.b16 %v297
        %v302 = vunpack.c.l.b16 %v298
        %v303 = vpack.c.b16 %v302, %v301
        %305 = vst [vmem:[#allocation2] sm:$0xff] %v303
        %306 = vrot.lane.b32.xlu0 %v269, 16
        %v307 = vpop.permute.xlu0 %306
        %308 = vrot.lane.b32.xlu0 %v270, 16
        %v309 = vpop.permute.xlu0 %308
        %vm310 = vcmask 130048
        %v311 = vsel %vm310, %v307, %v309
        %vm312 = vcmask 130048
        %v314 = vsel %vm312, 0, %v307
        %v316 = vunpack.c.l.b16 %v314
        %v317 = vunpack.c.l.b16 %v311
        %v318 = vpack.c.b16 %v317, %v316
        %320 = vst [vmem:[#allocation2 + $0x8] sm:$0xff] %v318
        %321 = vrot.lane.b32.xlu0 %v269, 15
        %v322 = vpop.permute.xlu0 %321
        %323 = vrot.lane.b32.xlu0 %v270, 15
        %v324 = vpop.permute.xlu0 %323
        %vm325 = vcmask 121856
        %v326 = vsel %vm325, %v322, %v324
        %vm328 = vcmask 121856
        %v330 = vsel %vm328, 0, %v322
        %v332 = vshrl.u32 %v264, 16
        %v333 = vpack.i.b16 %v332, %v332
        %v335 = vlaneseq
        %v336 = vshrl.u32 %v335, 7
        %v337 = vsub.s32 0, %v336
        %v338 = vrot.slane %v333, %v337
        %v339 = vshrl.u32 %v265, 16
        %v340 = vpack.i.b16 %v339, %v339
        %v342 = vlaneseq
        %v343 = vshrl.u32 %v342, 7
        %v344 = vsub.s32 0, %v343
        %v345 = vrot.slane %v340, %v344
        %v346 = vmul.bf16 %v330, %v338
        %v347 = vmul.bf16 %v326, %v345
        %v350 = vunpack.c.l.b16 %v346
        %v351 = vunpack.c.l.b16 %v347
        %v352 = vpack.c.b16 %v351, %v350
        %354 = vst [vmem:[#allocation2 + $0x10] sm:$0xff] %v352
        %355 = vrot.lane.b32.xlu0 %v269, 1
        %v356 = vpop.permute.xlu0 %355
        %357 = vrot.lane.b32.xlu0 %v270, 1
        %v358 = vpop.permute.xlu0 %357
        %vm359 = vcmask 7168
        %v360 = vsel %vm359, %v356, %v358
        %vm362 = vcmask 7168
        %v364 = vsel %vm362, 0, %v356
        %v366 = vmul.bf16 %v364, %v289
        %v367 = vmul.bf16 %v360, %v296
        %v370 = vunpack.c.l.b16 %v366
        %v371 = vunpack.c.l.b16 %v367
        %v372 = vpack.c.b16 %v371, %v370
        %374 = vst [vmem:[#allocation2 + $0x18] sm:$0xff] %v372
        %375 = vst [vmem:[#allocation2 + $0x20] sm:$0xff] %v251
        %376 = vrot.lane.b32.xlu0 %v269, 127
        %v377 = vpop.permute.xlu0 %376
        %378 = vrot.lane.b32.xlu0 %v270, 127
        %v379 = vpop.permute.xlu0 %378
        %vm380 = vcmask 1039360
        %v381 = vsel %vm380, %v377, %v379
        %vm383 = vcmask 1039360
        %v385 = vsel %vm383, %v379, 0
        %v387 = vmul.bf16 %v381, %v338
        %v388 = vmul.bf16 %v385, %v345
        %v391 = vunpack.c.l.b16 %v387
        %v392 = vunpack.c.l.b16 %v388
        %v393 = vpack.c.b16 %v392, %v391
        %395 = vst [vmem:[#allocation2 + $0x28] sm:$0xff] %v393
        %396 = vrot.lane.b32.xlu0 %v269, 113
        %v397 = vpop.permute.xlu0 %396
        %398 = vrot.lane.b32.xlu0 %v270, 113
        %v399 = vpop.permute.xlu0 %398
        %vm400 = vcmask 924672
        %v401 = vsel %vm400, %v397, %v399
        %vm403 = vcmask 924672
        %v405 = vsel %vm403, %v399, 0
        %v407 = vmul.bf16 %v401, %v289
        %v408 = vmul.bf16 %v405, %v296
        %v411 = vunpack.c.l.b16 %v407
        %v412 = vunpack.c.l.b16 %v408
        %v413 = vpack.c.b16 %v412, %v411
        %415 = vst [vmem:[#allocation2 + $0x30] sm:$0xff] %v413
        %416 = vrot.lane.b32.xlu0 %v269, 112
        %v417 = vpop.permute.xlu0 %416
        %418 = vrot.lane.b32.xlu0 %v270, 112
        %v419 = vpop.permute.xlu0 %418
        %vm420 = vcmask 916480
        %v421 = vsel %vm420, %v417, %v419
        %vm422 = vcmask 916480
        %v424 = vsel %vm422, %v419, 0
        %v426 = vunpack.c.l.b16 %v421
        %v427 = vunpack.c.l.b16 %v424
        %v428 = vpack.c.b16 %v427, %v426
        %430 = vst [vmem:[#allocation2 + $0x38] sm:$0xff] %v428
        %431 = vrot.lane.b32.xlu0 %v269, 111
        %v432 = vpop.permute.xlu0 %431
        %433 = vrot.lane.b32.xlu0 %v270, 111
        %v434 = vpop.permute.xlu0 %433
        %vm435 = vcmask 908288
        %v436 = vsel %vm435, %v432, %v434
        %vm438 = vcmask 908288
        %v440 = vsel %vm438, %v434, 0
        %v442 = vmul.bf16 %v436, %v338
        %v443 = vmul.bf16 %v440, %v345
        %v446 = vunpack.c.l.b16 %v442
        %v447 = vunpack.c.l.b16 %v443
        %v448 = vpack.c.b16 %v447, %v446
        %450 = vst [vmem:[#allocation2 + $0x40] sm:$0xff] %v448
        %v451 = vld [vmem:[%s1] sm:$0xf]
        %v452 = vld [vmem:[%s1 + $0x4] sm:$0xf]
        %v453 = vld [vmem:[#allocation2] sm:$0xff]
        %v454 = vld [vmem:[#allocation2 + $0x8] sm:$0xff]
        %v455 = vld [vmem:[#allocation2 + $0x10] sm:$0xff]
        %v456 = vld [vmem:[#allocation2 + $0x18] sm:$0xff]
        %v457 = vld [vmem:[#allocation2 + $0x20] sm:$0xff]
        %v458 = vld [vmem:[#allocation2 + $0x28] sm:$0xff]
        %v459 = vld [vmem:[#allocation2 + $0x30] sm:$0xff]
        %v460 = vld [vmem:[#allocation2 + $0x38] sm:$0xff]
        %v461 = vld [vmem:[#allocation2 + $0x40] sm:$0xff]
        %v462 = vld [vmem:[%s3] sm:$0xff]
        %v463 = vld [vmem:[%s3 + $0x8] sm:$0xff]
        %465 = vset.pattern.permute.xlu0 0
        %466 = vperm.xlu0 %465, %v462
        %v467 = vpop.permute.xlu0 %466
        %470 = vset.pattern.permute.xlu0 0
        %471 = vperm.xlu0 %470, %v463
        %v472 = vpop.permute.xlu0 %471
        %v476 = vunpack.c.l.b16 %v451
        %v477 = vunpack.c.l.b16 %v452
        %v478 = vpack.c.b16 %v477, %v476
        %v488 = vunpack.c.l.b16 %v453
        %v489 = vunpack.c.h.b16 %v453
        %v490 = vunpack.c.l.b16 %v454
        %v491 = vunpack.c.h.b16 %v454
        %v492 = vunpack.c.l.b16 %v455
        %v493 = vunpack.c.h.b16 %v455
        %v494 = vunpack.c.l.b16 %v456
        %v495 = vunpack.c.h.b16 %v456
        %v496 = vunpack.c.l.b16 %v457
        %v497 = vunpack.c.h.b16 %v457
        %v498 = vunpack.c.l.b16 %v458
        %v499 = vunpack.c.h.b16 %v458
        %v500 = vunpack.c.l.b16 %v459
        %v501 = vunpack.c.h.b16 %v459
        %v502 = vunpack.c.l.b16 %v460
        %v503 = vunpack.c.h.b16 %v460
        %v504 = vunpack.c.l.b16 %v461
        %v505 = vunpack.c.h.b16 %v461
        %v506 = vpack.c.b16 %v490, %v488
        %v507 = vpack.c.b16 %v491, %v489
        %v508 = vpack.c.b16 %v494, %v492
        %v509 = vpack.c.b16 %v495, %v493
        %v510 = vpack.c.b16 %v498, %v496
        %v511 = vpack.c.b16 %v499, %v497
        %v512 = vpack.c.b16 %v502, %v500
        %v513 = vpack.c.b16 %v503, %v501
        %v514 = vpack.c.b16 %v504, %v504
        %v515 = vpack.c.b16 %v505, %v505
        %vm524 = vcmask 588800
        %v526 = vsel %vm524, %v478, 0
        %vm528 = vcmask 1043456
        %v530 = vsel %vm528, %v514, 0
        %v533 = vsel %vm528, %v515, 0
        %535 = vmatprep.subr.bf16.mxu0 0
        %536 = vmatpush1.bf16.msra.mxu0 0
        %537 = vmatprep.subr.bf16.mxu0 0
        %538 = vmatpush1.bf16.msra.mxu0 0
        %539 = vmatprep.subr.bf16.mxu0 0
        %540 = vmatpush1.bf16.msra.mxu0 0
        %541 = vmatprep.subr.bf16.mxu0 %v533
        %542 = vmatpush1.bf16.msra.mxu0 %v530
        %543 = vmatprep.subr.bf16.mxu0 %v513
        %544 = vmatpush1.bf16.msra.mxu0 %v512
        %545 = vmatprep.subr.bf16.mxu0 %v511
        %546 = vmatpush1.bf16.msra.mxu0 %v510
        %547 = vmatprep.subr.bf16.mxu0 %v509
        %548 = vmatpush1.bf16.msra.mxu0 %v508
        %549 = vmatprep.subr.bf16.mxu0 %v507
        %550 = vmatpush1.bf16.msra.mxu0 %v506
        %551 = vmatprep.subr.bf16.mxu0 0
        %552 = vmatpush2.bf16.msra.mxu0 0
        %553 = vmatprep.subr.bf16.mxu0 0
        %554 = vmatpush2.bf16.msra.mxu0 0
        %555 = vmatprep.subr.bf16.mxu0 0
        %556 = vmatpush2.bf16.msra.mxu0 0
        %557 = vmatprep.subr.bf16.mxu0 0
        %558 = vmatpush2.bf16.msra.mxu0 0
        %559 = vmatprep.subr.bf16.mxu0 0
        %560 = vmatpush2.bf16.msra.mxu0 0
        %561 = vmatprep.subr.bf16.mxu0 0
        %562 = vmatpush2.bf16.msra.mxu0 0
        %563 = vmatprep.subr.bf16.mxu0 0
        %564 = vmatpush2.bf16.msra.mxu0 0
        %565 = vmatprep.subr.bf16.mxu0 0
        %566 = vmatpush2.bf16.msra.mxu0 0
        %567 = vmatprep.mubr.bf16.mxu0 0
        %568 = vmatmul.mubr.bf16.gmra.mxu0 %v526
        %v569 = vpop.f32.mrf.mxu0
        %v570 = vadd.f32 %v467, %v569
        %v571 = vpop.f32.mrf.mxu0
        %v572 = vadd.f32 %v467, %v571
        %v573 = vpop.f32.mrf.mxu0
        %v574 = vadd.f32 %v472, %v573
        %v575 = vpop.f32.mrf.mxu0
        %v576 = vadd.f32 %v472, %v575
        %577 = vdwg.mxu0
        %v578 = vmax.f32 %v570, 0.0
        %v579 = vmax.f32 %v572, 0.0
        %v580 = vmax.f32 %v574, 0.0
        %v581 = vmax.f32 %v576, 0.0
        %v582 = vpack.c.bf16 %v580, %v578
        %v583 = vpack.c.bf16 %v581, %v579
        %v584 = vld [vmem:[%s2] sm:$0xf]
        %v585 = vld [vmem:[%s2 + $0x4] sm:$0xf]
        %v586 = vld [vmem:[%s2 + $0x8] sm:$0x1]
        %v590 = vunpack.c.l.b16 %v584
        %v591 = vunpack.c.l.b16 %v585
        %v592 = vunpack.c.l.b16 %v586
        %v593 = vpack.c.b16 %v591, %v590
        %v594 = vpack.c.b16 %v592, %v592
        %v596 = vsel %vm312, %v593, 0
        %v599 = vsel %vm312, %v594, 0
        %601 = vmatprep.subr.bf16.mxu0 0
        %602 = vmatpush1.bf16.msra.mxu0 0
        %603 = vmatprep.subr.bf16.mxu0 0
        %604 = vmatpush1.bf16.msra.mxu0 0
        %605 = vmatprep.subr.bf16.mxu0 0
        %606 = vmatpush1.bf16.msra.mxu0 0
        %607 = vmatprep.subr.bf16.mxu0 0
        %608 = vmatpush1.bf16.msra.mxu0 0
        %609 = vmatprep.subr.bf16.mxu0 0
        %610 = vmatpush1.bf16.msra.mxu0 0
        %611 = vmatprep.subr.bf16.mxu0 0
        %612 = vmatpush1.bf16.msra.mxu0 0
        %613 = vmatprep.subr.bf16.mxu0 0
        %614 = vmatpush1.bf16.msra.mxu0 0
        %615 = vmatprep.subr.bf16.mxu0 %v583
        %616 = vmatpush1.bf16.msra.mxu0 %v582
        %617 = vmatprep.subr.bf16.mxu0 0
        %618 = vmatpush2.bf16.msra.mxu0 0
        %619 = vmatprep.subr.bf16.mxu0 0
        %620 = vmatpush2.bf16.msra.mxu0 0
        %621 = vmatprep.subr.bf16.mxu0 0
        %622 = vmatpush2.bf16.msra.mxu0 0
        %623 = vmatprep.subr.bf16.mxu0 0
        %624 = vmatpush2.bf16.msra.mxu0 0
        %625 = vmatprep.subr.bf16.mxu0 0
        %626 = vmatpush2.bf16.msra.mxu0 0
        %627 = vmatprep.subr.bf16.mxu0 0
        %628 = vmatpush2.bf16.msra.mxu0 0
        %629 = vmatprep.subr.bf16.mxu0 0
        %630 = vmatpush2.bf16.msra.mxu0 0
        %631 = vmatprep.subr.bf16.mxu0 0
        %632 = vmatpush2.bf16.msra.mxu0 0
        %633 = vmatprep.mubr.bf16.mxu0 0
        %634 = vmatmul.mubr.bf16.gmra.mxu0 %v596
        %v635 = vpop.f32.mrf.mxu0
        %v636 = vadd.f32 0.0, %v635
        %v637 = vpop.f32.mrf.mxu0
        %v638 = vadd.f32 0.0, %v637
        %v639 = vpop.f32.mrf.mxu0
        %v640 = vadd.f32 0.0, %v639
        %v641 = vpop.f32.mrf.mxu0
        %v642 = vadd.f32 0.0, %v641
        %643 = vmatprep.mubr.bf16.mxu0 0
        %644 = vmatmul.mubr.bf16.gmra.mxu0 %v599
        %v645 = vpop.f32.mrf.mxu0
        %v646 = vadd.f32 0.0, %v645
        %v647 = vpop.f32.mrf.mxu0
        %v648 = vadd.f32 0.0, %v647
        %v649 = vpop.f32.mrf.mxu0
        %v650 = vpop.f32.mrf.mxu0
        %651 = vdwg.mxu0
        %654 = vrot.lane.b32.xlu0 %v636, 17
        %v655 = vpop.permute.xlu0 %654
        %656 = vrot.lane.b32.xlu0 %v638, 17
        %v657 = vpop.permute.xlu0 %656
        %v658 = vsel %vm278, %v655, %v657
        %v661 = vsel %vm278, 0.0, %v655
        %v662 = vlaneseq
        %v663 = vshrl.u32 %v662, 7
        %v664 = vsub.s32 0, %v663
        %v665 = vrot.slane %v252, %v664
        %v666 = vlaneseq
        %v667 = vshrl.u32 %v666, 7
        %v668 = vsub.s32 2, %v667
        %v669 = vrot.slane %v252, %v668
        %v672 = vlaneseq
        %v673 = vshrl.u32 %v672, 7
        %v674 = vsub.s32 0, %v673
        %v675 = vrot.slane %v665, %v674
        %v676 = vlaneseq
        %v677 = vshrl.u32 %v676, 7
        %v678 = vsub.s32 0, %v677
        %v679 = vrot.slane %v669, %v678
        %v680 = vmul.f32 %v661, %v675
        %v681 = vmul.f32 %v658, %v679
        %v682 = vadd.f32 %v680, 0.0
        %v683 = vadd.f32 %v681, 0.0
        %v684 = vrot.slane %v636, 2
        %v685 = vrot.slane %v638, 2
        %686 = vrot.lane.b32.xlu0 %v684, 16
        %v687 = vpop.permute.xlu0 %686
        %688 = vrot.lane.b32.xlu0 %v685, 16
        %v689 = vpop.permute.xlu0 %688
        %v690 = vsel %vm312, %v687, %v689
        %v693 = vsel %vm312, 0.0, %v687
        %v694 = vadd.f32 %v682, %v693
        %v695 = vadd.f32 %v683, %v690
        %v696 = vrot.slane %v636, 4
        %v697 = vrot.slane %v638, 4
        %698 = vrot.lane.b32.xlu0 %v696, 15
        %v699 = vpop.permute.xlu0 %698
        %700 = vrot.lane.b32.xlu0 %v697, 15
        %v701 = vpop.permute.xlu0 %700
        %v702 = vsel %vm328, %v699, %v701
        %v705 = vsel %vm328, 0.0, %v699
        %v706 = vlaneseq
        %v707 = vshrl.u32 %v706, 7
        %v708 = vsub.s32 1, %v707
        %v709 = vrot.slane %v252, %v708
        %v710 = vlaneseq
        %v711 = vshrl.u32 %v710, 7
        %v712 = vsub.s32 3, %v711
        %v713 = vrot.slane %v252, %v712
        %v716 = vlaneseq
        %v717 = vshrl.u32 %v716, 7
        %v718 = vsub.s32 1, %v717
        %v719 = vrot.slane %v709, %v718
        %v720 = vlaneseq
        %v721 = vshrl.u32 %v720, 7
        %v722 = vsub.s32 1, %v721
        %v723 = vrot.slane %v713, %v722
        %v724 = vmul.f32 %v705, %v719
        %v725 = vmul.f32 %v702, %v723
        %v726 = vadd.f32 %v694, %v724
        %v727 = vadd.f32 %v695, %v725
        %v728 = vrot.slane %v636, 6
        %v729 = vrot.slane %v638, 6
        %730 = vrot.lane.b32.xlu0 %v728, 1
        %v731 = vpop.permute.xlu0 %730
        %732 = vrot.lane.b32.xlu0 %v729, 1
        %v733 = vpop.permute.xlu0 %732
        %v734 = vsel %vm362, %v731, %v733
        %v737 = vsel %vm362, 0.0, %v731
        %v738 = vmul.f32 %v737, %v675
        %v739 = vmul.f32 %v734, %v679
        %v740 = vadd.f32 %v726, %v738
        %v741 = vadd.f32 %v727, %v739
        %v742 = vadd.f32 %v740, %v640
        %v743 = vadd.f32 %v741, %v642
        %746 = vrot.lane.b32.xlu0 %v640, 127
        %v747 = vpop.permute.xlu0 %746
        %748 = vrot.lane.b32.xlu0 %v642, 127
        %v749 = vpop.permute.xlu0 %748
        %v750 = vsel %vm383, %v747, %v749
        %v753 = vsel %vm383, %v749, 0.0
        %v754 = vmul.f32 %v750, %v719
        %v755 = vmul.f32 %v753, %v723
        %v758 = vrot.slane %v754, 2
        %v759 = vrot.slane %v755, 2
        %v762 = vadd.f32 %v742, %v758
        %v763 = vadd.f32 %v743, %v759
        %764 = vrot.lane.b32.xlu0 %v640, 113
        %v765 = vpop.permute.xlu0 %764
        %766 = vrot.lane.b32.xlu0 %v642, 113
        %v767 = vpop.permute.xlu0 %766
        %v768 = vsel %vm403, %v765, %v767
        %v771 = vsel %vm403, %v767, 0.0
        %v772 = vmul.f32 %v768, %v675
        %v773 = vmul.f32 %v771, %v679
        %v776 = vrot.slane %v772, 4
        %v777 = vrot.slane %v773, 4
        %v780 = vadd.f32 %v762, %v776
        %v781 = vadd.f32 %v763, %v777
        %782 = vrot.lane.b32.xlu0 %v640, 112
        %v783 = vpop.permute.xlu0 %782
        %784 = vrot.lane.b32.xlu0 %v642, 112
        %v785 = vpop.permute.xlu0 %784
        %v786 = vsel %vm422, %v783, %v785
        %v788 = vsel %vm422, %v785, 0.0
        %v790 = vrot.slane %v786, 6
        %v791 = vrot.slane %v788, 6
        %v794 = vadd.f32 %v780, %v790
        %v795 = vadd.f32 %v781, %v791
        %798 = vrot.lane.b32.xlu0 %v646, 111
        %v799 = vpop.permute.xlu0 %798
        %800 = vrot.lane.b32.xlu0 %v648, 111
        %v801 = vpop.permute.xlu0 %800
        %v802 = vsel %vm438, %v799, %v801
        %v805 = vsel %vm438, %v801, 0.0
        %v806 = vmul.f32 %v802, %v719
        %v807 = vmul.f32 %v805, %v723
        %v808 = vadd.f32 %v794, %v806
        %v809 = vadd.f32 %v795, %v807
        %v810 = vld [vmem:[%s4] sm:$0x3]
        %812 = vset.pattern.permute.xlu0 0
        %813 = vperm.xlu0 %812, %v810
        %v814 = vpop.permute.xlu0 %813
        %v816 = vadd.f32 %v808, %v814
        %v817 = vadd.f32 %v809, %v814
        %v820 = vcombine.low %v816, %v817
        %v822 = vunpack.c.l.s4 1983009808
        %v823 = vunpack.c.0.s8 %v822
        %v824 = vlaneseq
        %v825 = vshrl.u32 %v824, 7
        %v826 = vsub.s32 %v823, %v825
        %v827 = vrot.slane %v820, %v826
        %829 = vst [vmem:[%s244] sm:$0xf] %v827
        %s830 = sand.u32 %s159, 1
        %s831 = scalar_lea.sflag [#allocation4], %s830
        %s832 = sand.u32 %s159, 1
        %s833 = smul.addr %s832, 4
        %s834 = scalar_lea.vmem [#allocation3], %s833
        // Predicated region
        $region45: #{tpu_custom_call.1} parent=43 // pred_check
          %p835 = pneg %p169
        $region46: #{tpu_custom_call.1} parent=43 // pred_check_branch
          %837 = sbr.rel (%p835) target = $region48
        $region47: #{tpu_custom_call.1} parent=43 // pred_region
          %s839 = ssub.s32 64, 64
          %840 = vsyncadd %s831, %s839
          %s841 = smul.addr %s20, 2
          %s842 = smul.addr %s841, 32
          %s843 = scalar_lea.hbm %s6, %s842
          %s845 = sshll.u32 %s834, 4
          %s846 = int_to_ptr.vmem [resolvable:$true] %s845
          %848 = dma.vmem_to_hbm [thread:$0]  %s846, 64, %s843, %s831
        $region48: #{tpu_custom_call.1} parent=43 // pred_fallthru
          _
      $region44: #{tpu_custom_call.1} parent=5 // pred_fallthru
        _
      %p849 = scmp.le.s32.totalorder 2, %s15
      // Predicated region
      $region49: #{tpu_custom_call.1} parent=5 // pred_check
        %p850 = pneg %p849
      $region50: #{tpu_custom_call.1} parent=5 // pred_check_branch
        %852 = sbr.rel (%p850) target = $region52
      $region51: #{tpu_custom_call.1} parent=5 // pred_region
        %s853 = ssub.s32 %s15, 2
        // Predicated region
        $region53: #{tpu_custom_call.1} parent=51 // pred_check
          %p854 = pneg %p175
        $region54: #{tpu_custom_call.1} parent=51 // pred_check_branch
          %856 = sbr.rel (%p854) target = $region56
        $region55: #{tpu_custom_call.1} parent=51 // pred_region
          %s857 = sand.u32 %s160, 1
          %s858 = scalar_lea.sflag [#allocation4], %s857
          %s859 = sand.u32 %s160, 1
          %s860 = smul.addr %s859, 4
          %s861 = scalar_lea.vmem [#allocation3], %s860
          %862 = dma.done %s858, 64
        $region56: #{tpu_custom_call.1} parent=51 // pred_fallthru
          _
      $region52: #{tpu_custom_call.1} parent=5 // pred_fallthru
        _
    $region6: #{tpu_custom_call.1} parent=1 // loop_footer
      %s19 = sadd.s32 1, %s15
    $region7: #{tpu_custom_call.1} parent=1 // loop_footer_branch
      %14 = sbr.rel target = $region3
    $region8: #{tpu_custom_call.1} parent=1 // loop_exit
      _
    %863 = vsyncpa [#allocation4], 1
    %s864 = scalar_lea.sflag [#allocation4], 1
    %865 = vsyncpa %s864, 1

</llo_original>
